<compile_context>
chip_gen: v7x
topology: tpu7x:2x2x1
jax: 0.10.0
libtpu: 0.0.40
codegen_flags: <defaults>
</compile_context>

<pallas_src>
import jax
import jax.numpy as jnp
from jax import lax
from jax.experimental import pallas as pl
from jax.experimental.pallas import tpu as pltpu  # noqa: F401  (TPU backend)

NEG_SLOPE = 0.2  # PyG GATConv default negative_slope


# ----------------------------- fused Pallas kernel ------------------------- #

def _mm_fused_kernel(edges_ref, x_ref, wh_ref, fw_ref, vec_ref, o_ref):
    n = o_ref.shape[0]
    dim = o_ref.shape[1] // 4
    e_cnt = edges_ref.shape[1]

    # ---- dense adjacency mask from graph_edges (built once, reused 3x) ----
    # adj[i, j] > 0  <=>  edge j -> i exists; self loops added (GATConv default)
    node_ids = lax.broadcasted_iota(jnp.int32, (n, e_cnt), 0)
    src_oh = (node_ids == edges_ref[0:1, :]).astype(jnp.float32)          # (N,E)
    dst_oh = (node_ids == edges_ref[1:2, :]).astype(jnp.float32)          # (N,E)
    adj = lax.dot_general(dst_oh, src_oh, (((1,), (1,)), ((), ())),
                          preferred_element_type=jnp.float32)             # (N,N)
    row = lax.broadcasted_iota(jnp.int32, (n, n), 0)
    col = lax.broadcasted_iota(jnp.int32, (n, n), 1)
    connected = jnp.logical_or(adj > 0.5, row == col)
    neg_mask = jnp.where(connected, 0.0, -1e30).astype(jnp.float32)       # additive

    # ---- ONE block-diagonal matmul -> [h_ent | h_img | h_txt]  (N, 3*dim) ----
    # (projection linears already folded into wh / vec row 0 on the host)
    h_all = (jnp.dot(x_ref[...], wh_ref[...], preferred_element_type=jnp.float32)
             + vec_ref[0:1, :])

    a_src_all = vec_ref[1:2, :]       # (1, 3*dim)
    a_dst_all = vec_ref[2:3, :]       # (1, 3*dim)
    gat_b_all = vec_ref[3:4, :]       # (1, 3*dim)
    fus_b = vec_ref[4:5, 0:dim]       # (1, dim)

    # ---- one GraphConv block: GATConv -> dropout(eval) -> F.normalize ----
    def gat_block(h, a_src, a_dst, b):
        # e[i, j] = LeakyReLU(a_dst . h_i + a_src . h_j)
        s_dst = jnp.sum(h * a_dst, axis=-1, keepdims=True)                # (N,1)
        s_src = lax.dot_general(a_src, h, (((1,), (1,)), ((), ())),
                                preferred_element_type=jnp.float32)       # (1,N)
        e = s_dst + s_src
        e = jnp.where(e > 0, e, NEG_SLOPE * e) + neg_mask
        # masked softmax over incoming edges (row i = target node i)
        e_max = jnp.max(e, axis=-1, keepdims=True)
        p = jnp.exp(e - e_max)                                            # masked -> 0
        attn = p / jnp.sum(p, axis=-1, keepdims=True)   # exact reciprocal (review)
        out = jnp.dot(attn, h, preferred_element_type=jnp.float32) + b
        # Dropout(p=0.3): identity in eval mode.
        # F.normalize: out / max(||out||_2, 1e-12)
        ss = jnp.sum(out * out, axis=-1, keepdims=True)
        return out * lax.rsqrt(jnp.maximum(ss, 1e-24))

    outs = [gat_block(h_all[:, m * dim:(m + 1) * dim],
                      a_src_all[:, m * dim:(m + 1) * dim],
                      a_dst_all[:, m * dim:(m + 1) * dim],
                      gat_b_all[:, m * dim:(m + 1) * dim]) for m in range(3)]
    cat96 = jnp.concatenate(outs, axis=-1)                                # (N, 3*dim)

    # ---- fusion Linear(3*dim -> dim) as ONE matmul reusing cat96 ----
    mm = jnp.dot(cat96, fw_ref[...], preferred_element_type=jnp.float32) + fus_b

    # ---- single lane-dense (N, 4*dim) = (8, 128) store ----
    o_ref[...] = jnp.concatenate([cat96, mm], axis=-1)


def _mm_fused_call(graph_edges, x_slab, wh, fw, vec):
    n, dtot = x_slab.shape
    dim = fw.shape[-1]
    e_cnt = graph_edges.shape[1]

    full = lambda shape: pl.BlockSpec(shape, lambda: (0,) * len(shape))

    return pl.pallas_call(
        _mm_fused_kernel,
        out_shape=jax.ShapeDtypeStruct((n, 4 * dim), jnp.float32),
        in_specs=[
            full((2, e_cnt)),     # graph_edges (int32)
            full((n, dtot)),      # [entity_param | img_feat | txt_feat]
            full(wh.shape),       # block-diagonal folded GAT weights (dtot, 3*dim)
            full(fw.shape),       # fusion W (3*dim, dim)
            full(vec.shape),      # [b_h; a_src; a_dst; gat_b; fus_b] (5, 3*dim)
        ],
        out_specs=full((n, 4 * dim)),
        # tiny, latency-bound kernel: keep XLA from over-serializing around it
        cost_estimate=pl.CostEstimate(flops=300_000, transcendentals=256,
                                      bytes_accessed=80_000),
    )(graph_edges, x_slab, wh, fw, vec)


# ------------------------------ params / glue ------------------------------ #

def _glorot(key, shape):
    fan_in, fan_out = shape[0], shape[1] if len(shape) > 1 else shape[0]
    lim = (6.0 / (fan_in + fan_out)) ** 0.5
    return jax.random.uniform(key, shape, jnp.float32, -lim, lim)


def init_params(key, dim_ent, dim_img, dim_txt, dim, n_nodes):
    assert dim_ent == dim, "fusion Linear(3*dim_ent, dim) requires dim_ent == dim"
    keys = jax.random.split(key, 10)

    gat_keys = jax.random.split(keys[7], 9)
    gat_w = jnp.stack([_glorot(gat_keys[3 * i + 0], (dim, dim)) for i in range(3)])
    gat_asrc = jnp.stack([_glorot(gat_keys[3 * i + 1], (1, dim)) for i in range(3)])
    gat_adst = jnp.stack([_glorot(gat_keys[3 * i + 2], (1, dim)) for i in range(3)])
    gat_b = jnp.zeros((3, 1, dim), jnp.float32)

    return {
        "img_w": _glorot(keys[0], (dim_img, dim)),
        "img_b": jax.random.uniform(keys[1], (1, dim), jnp.float32, -0.1, 0.1),
        "txt_w": _glorot(keys[2], (dim_txt, dim)),
        "txt_b": jax.random.uniform(keys[3], (1, dim), jnp.float32, -0.1, 0.1),
        "fus_w": _glorot(keys[4], (3 * dim_ent, dim)),
        "fus_b": jax.random.uniform(keys[5], (1, dim), jnp.float32, -0.1, 0.1),
        "entity_feat": _glorot(keys[6], (n_nodes, dim)),  # nn.Parameter (xavier)
        "gat_w": gat_w,        # (3, dim, dim) stacked (ent, img, txt)
        "gat_b": gat_b,        # (3, 1, dim)
        "gat_asrc": gat_asrc,  # (3, 1, dim)
        "gat_adst": gat_adst,  # (3, 1, dim)
    }


def pack_params(p, dim, dim_img, dim_txt):
    """Host-side one-time folding + packing into a few lane-dense slabs."""
    # fold img/txt projection linears into the GAT input transform
    wh_img = p["img_w"] @ p["gat_w"][1]                       # (dim_img, dim)
    wh_txt = p["txt_w"] @ p["gat_w"][2]                       # (dim_txt, dim)
    dtot = dim + dim_img + dim_txt
    wh = jnp.zeros((dtot, 3 * dim), jnp.float32)
    wh = wh.at[0:dim, 0:dim].set(p["gat_w"][0])
    wh = wh.at[dim:dim + dim_img, dim:2 * dim].set(wh_img)
    wh = wh.at[dim + dim_img:dtot, 2 * dim:3 * dim].set(wh_txt)

    b_h = jnp.concatenate([jnp.zeros((1, dim), jnp.float32),
                           p["img_b"] @ p["gat_w"][1],
                           p["txt_b"] @ p["gat_w"][2]], axis=-1)          # (1, 3*dim)
    a_src = p["gat_asrc"].reshape(1, 3 * dim)
    a_dst = p["gat_adst"].reshape(1, 3 * dim)
    gat_b = p["gat_b"].reshape(1, 3 * dim)
    fus_b = jnp.pad(p["fus_b"], ((0, 0), (0, 2 * dim)))                   # (1, 3*dim)
    vec = jnp.concatenate([b_h, a_src, a_dst, gat_b, fus_b], axis=0)      # (5, 3*dim)

    return {"entity_feat": p["entity_feat"], "wh": wh, "fw": p["fus_w"], "vec": vec}


@jax.jit
def mm_model_forward(packed, entity_feat_1, image_feat, text_feat, graph_edges):
    # entity_feat_1 is accepted but unused, matching the PyTorch forward
    # (the model uses its learned self.entity_feat parameter instead).
    del entity_feat_1
    dim = packed["fw"].shape[-1]
    x_slab = jnp.concatenate(
        [packed["entity_feat"], image_feat, text_feat], axis=-1)          # (N, dtot)
    out = _mm_fused_call(graph_edges, x_slab, packed["wh"], packed["fw"],
                         packed["vec"])
    entity_feat = out[:, 0 * dim:1 * dim]
    image_out = out[:, 1 * dim:2 * dim]
    text_out = out[:, 2 * dim:3 * dim]
    mm_feat = out[:, 3 * dim:4 * dim]
    return entity_feat, image_out, text_out, mm_feat


# ---------------------------------- main ----------------------------------- #

if __name__ == "__main__":
    n_nodes, n_edges = 8, 16
    dim = 32          # args.dim
    dim_ent = 32      # must equal args.dim for the fusion layer to be well-formed
    dim_img = 64
    dim_txt = 48

    root = jax.random.PRNGKey(0)
    k_par, k_ent, k_img, k_txt, k_e = jax.random.split(root, 5)

    raw_params = init_params(k_par, dim_ent, dim_img, dim_txt, dim, n_nodes)
    packed_params = pack_params(raw_params, dim, dim_img, dim_txt)

    entity_feat_1 = jax.random.normal(k_ent, (n_nodes, dim_ent), jnp.float32)
    image_feat = jax.random.normal(k_img, (n_nodes, dim_img), jnp.float32)
    text_feat = jax.random.normal(k_txt, (n_nodes, dim_txt), jnp.float32)
    # distinct (src, dst) pairs so the dense adjacency matches PyG edge-softmax
    pair_idx = jax.random.choice(k_e, n_nodes * n_nodes, (n_edges,), replace=False)
    graph_edges = jnp.stack([pair_idx // n_nodes, pair_idx % n_nodes]).astype(jnp.int32)

    ent, img, txt, mm = mm_model_forward(
        packed_params, entity_feat_1, image_feat, text_feat, graph_edges
    )
    jax.block_until_ready((ent, img, txt, mm))

    assert ent.shape == (n_nodes, dim)
    assert img.shape == (n_nodes, dim)
    assert txt.shape == (n_nodes, dim)
    assert mm.shape == (n_nodes, dim)
    assert bool(jnp.all(jnp.isfinite(mm)))
    print("KERNEL_OK")
</pallas_src>

<mosaic_0001>
module attributes {stable_mosaic.version = 11 : i64} {
  func.func @_mm_fused_kernel(%arg0: memref<2x16xi32, #tpu.memory_space<vmem>>, %arg1: memref<8x144xf32, #tpu.memory_space<vmem>>, %arg2: memref<144x96xf32, #tpu.memory_space<vmem>>, %arg3: memref<96x32xf32, #tpu.memory_space<vmem>>, %arg4: memref<5x96xf32, #tpu.memory_space<vmem>>, %arg5: memref<8x128xf32, #tpu.memory_space<vmem>>) attributes {dimension_semantics = [], scalar_prefetch = 0 : i64, scratch_operands = 0 : i64, tpu.core_type = #tpu.core_type<tc>} {
    %0 = tpu.iota {dimensions = array<i32: 0>} : vector<8x16xi32>
    %c0 = arith.constant 0 : index
    %c0_0 = arith.constant 0 : index
    %1 = vector.load %arg0[%c0, %c0_0] : memref<2x16xi32, #tpu.memory_space<vmem>>, vector<1x16xi32>
    %2 = vector.broadcast %1 : vector<1x16xi32> to vector<8x16xi32>
    %3 = arith.cmpi eq, %0, %2 : vector<8x16xi32>
    %4 = arith.extui %3 : vector<8x16xi1> to vector<8x16xi32>
    %5 = arith.sitofp %4 : vector<8x16xi32> to vector<8x16xf32>
    %c1 = arith.constant 1 : index
    %c0_1 = arith.constant 0 : index
    %6 = vector.load %arg0[%c1, %c0_1] : memref<2x16xi32, #tpu.memory_space<vmem>>, vector<1x16xi32>
    %7 = vector.broadcast %6 : vector<1x16xi32> to vector<8x16xi32>
    %8 = arith.cmpi eq, %0, %7 : vector<8x16xi32>
    %9 = arith.extui %8 : vector<8x16xi1> to vector<8x16xi32>
    %10 = arith.sitofp %9 : vector<8x16xi32> to vector<8x16xf32>
    %cst = arith.constant dense<0.000000e+00> : vector<8x8xf32>
    %11 = tpu.matmul %10, %5, %cst {dimension_numbers = #tpu.dot_dimension_numbers<[1], [1], [0], [0], [0, 0, 1, 0], [], []>} : vector<8x16xf32>, vector<8x16xf32>, vector<8x8xf32> -> vector<8x8xf32>
    %12 = tpu.iota {dimensions = array<i32: 0>} : vector<8x8xi32>
    %13 = tpu.iota {dimensions = array<i32: 1>} : vector<8x8xi32>
    %cst_2 = arith.constant 5.000000e-01 : f32
    %14 = vector.broadcast %cst_2 : f32 to vector<8x8xf32>
    %15 = arith.cmpf ogt, %11, %14 : vector<8x8xf32>
    %16 = arith.cmpi eq, %12, %13 : vector<8x8xi32>
    %17 = arith.ori %15, %16 : vector<8x8xi1>
    %cst_3 = arith.constant 0.000000e+00 : f32
    %cst_4 = arith.constant -1.000000e+30 : f32
    %18 = vector.broadcast %cst_3 : f32 to vector<8x8xf32>
    %19 = vector.broadcast %cst_4 : f32 to vector<8x8xf32>
    %20 = arith.select %17, %18, %19 : vector<8x8xi1>, vector<8x8xf32>
    %c0_5 = arith.constant 0 : index
    %c0_6 = arith.constant 0 : index
    %21 = vector.load %arg1[%c0_5, %c0_6] : memref<8x144xf32, #tpu.memory_space<vmem>>, vector<8x144xf32>
    %c0_7 = arith.constant 0 : index
    %c0_8 = arith.constant 0 : index
    %22 = vector.load %arg2[%c0_7, %c0_8] : memref<144x96xf32, #tpu.memory_space<vmem>>, vector<144x96xf32>
    %cst_9 = arith.constant dense<0.000000e+00> : vector<8x96xf32>
    %23 = tpu.matmul %21, %22, %cst_9 {dimension_numbers = #tpu.dot_dimension_numbers<[1], [0], [0], [1], [0, 0, 1, 1], [], []>} : vector<8x144xf32>, vector<144x96xf32>, vector<8x96xf32> -> vector<8x96xf32>
    %c0_10 = arith.constant 0 : index
    %c0_11 = arith.constant 0 : index
    %24 = vector.load %arg4[%c0_10, %c0_11] : memref<5x96xf32, #tpu.memory_space<vmem>>, vector<1x96xf32>
    %25 = vector.broadcast %24 : vector<1x96xf32> to vector<8x96xf32>
    %26 = arith.addf %23, %25 : vector<8x96xf32>
    %c1_12 = arith.constant 1 : index
    %c0_13 = arith.constant 0 : index
    %27 = vector.load %arg4[%c1_12, %c0_13] : memref<5x96xf32, #tpu.memory_space<vmem>>, vector<1x96xf32>
    %c2 = arith.constant 2 : index
    %c0_14 = arith.constant 0 : index
    %28 = vector.load %arg4[%c2, %c0_14] : memref<5x96xf32, #tpu.memory_space<vmem>>, vector<1x96xf32>
    %c3 = arith.constant 3 : index
    %c0_15 = arith.constant 0 : index
    %29 = vector.load %arg4[%c3, %c0_15] : memref<5x96xf32, #tpu.memory_space<vmem>>, vector<1x96xf32>
    %c4 = arith.constant 4 : index
    %c0_16 = arith.constant 0 : index
    %30 = vector.load %arg4[%c4, %c0_16] : memref<5x96xf32, #tpu.memory_space<vmem>>, vector<1x32xf32>
    %31 = vector.extract_strided_slice %26 {offsets = [0, 0], sizes = [8, 32], strides = [1, 1]} : vector<8x96xf32> to vector<8x32xf32>
    %32 = vector.extract_strided_slice %27 {offsets = [0, 0], sizes = [1, 32], strides = [1, 1]} : vector<1x96xf32> to vector<1x32xf32>
    %33 = vector.extract_strided_slice %28 {offsets = [0, 0], sizes = [1, 32], strides = [1, 1]} : vector<1x96xf32> to vector<1x32xf32>
    %34 = vector.extract_strided_slice %29 {offsets = [0, 0], sizes = [1, 32], strides = [1, 1]} : vector<1x96xf32> to vector<1x32xf32>
    %35 = vector.broadcast %33 : vector<1x32xf32> to vector<8x32xf32>
    %36 = arith.mulf %31, %35 : vector<8x32xf32>
    %cst_17 = arith.constant dense<0.000000e+00> : vector<8xf32>
    %37 = vector.multi_reduction <add>, %36, %cst_17 [1] : vector<8x32xf32> to vector<8xf32>
    %38 = vector.shape_cast %37 : vector<8xf32> to vector<8x1xf32>
    %cst_18 = arith.constant dense<0.000000e+00> : vector<1x8xf32>
    %39 = tpu.matmul %32, %31, %cst_18 {dimension_numbers = #tpu.dot_dimension_numbers<[1], [1], [0], [0], [0, 0, 1, 0], [], []>} : vector<1x32xf32>, vector<8x32xf32>, vector<1x8xf32> -> vector<1x8xf32>
    %40 = vector.broadcast %38 : vector<8x1xf32> to vector<8x8xf32>
    %41 = vector.broadcast %39 : vector<1x8xf32> to vector<8x8xf32>
    %42 = arith.addf %40, %41 : vector<8x8xf32>
    %cst_19 = arith.constant 0.000000e+00 : f32
    %43 = vector.broadcast %cst_19 : f32 to vector<8x8xf32>
    %44 = arith.cmpf ogt, %42, %43 : vector<8x8xf32>
    %cst_20 = arith.constant 2.000000e-01 : f32
    %45 = vector.broadcast %cst_20 : f32 to vector<8x8xf32>
    %46 = arith.mulf %45, %42 : vector<8x8xf32>
    %47 = arith.select %44, %42, %46 : vector<8x8xi1>, vector<8x8xf32>
    %48 = arith.addf %47, %20 : vector<8x8xf32>
    %cst_21 = arith.constant dense<0xFF800000> : vector<8xf32>
    %49 = vector.multi_reduction <maximumf>, %48, %cst_21 [1] : vector<8x8xf32> to vector<8xf32>
    %50 = vector.shape_cast %49 : vector<8xf32> to vector<8x1xf32>
    %51 = vector.broadcast %50 : vector<8x1xf32> to vector<8x8xf32>
    %52 = arith.subf %48, %51 : vector<8x8xf32>
    %53 = math.exp %52 : vector<8x8xf32>
    %cst_22 = arith.constant dense<0.000000e+00> : vector<8xf32>
    %54 = vector.multi_reduction <add>, %53, %cst_22 [1] : vector<8x8xf32> to vector<8xf32>
    %55 = vector.shape_cast %54 : vector<8xf32> to vector<8x1xf32>
    %56 = vector.broadcast %55 : vector<8x1xf32> to vector<8x8xf32>
    %57 = arith.divf %53, %56 : vector<8x8xf32>
    %cst_23 = arith.constant dense<0.000000e+00> : vector<8x32xf32>
    %58 = tpu.matmul %57, %31, %cst_23 {dimension_numbers = #tpu.dot_dimension_numbers<[1], [0], [0], [1], [0, 0, 1, 1], [], []>} : vector<8x8xf32>, vector<8x32xf32>, vector<8x32xf32> -> vector<8x32xf32>
    %59 = vector.broadcast %34 : vector<1x32xf32> to vector<8x32xf32>
    %60 = arith.addf %58, %59 : vector<8x32xf32>
    %61 = arith.mulf %60, %60 : vector<8x32xf32>
    %cst_24 = arith.constant dense<0.000000e+00> : vector<8xf32>
    %62 = vector.multi_reduction <add>, %61, %cst_24 [1] : vector<8x32xf32> to vector<8xf32>
    %63 = vector.shape_cast %62 : vector<8xf32> to vector<8x1xf32>
    %cst_25 = arith.constant 1.000000e-24 : f32
    %64 = vector.broadcast %cst_25 : f32 to vector<8x1xf32>
    %65 = arith.maximumf %63, %64 : vector<8x1xf32>
    %66 = math.rsqrt %65 : vector<8x1xf32>
    %67 = vector.broadcast %66 : vector<8x1xf32> to vector<8x32xf32>
    %68 = arith.mulf %60, %67 : vector<8x32xf32>
    %69 = vector.extract_strided_slice %26 {offsets = [0, 32], sizes = [8, 32], strides = [1, 1]} : vector<8x96xf32> to vector<8x32xf32>
    %70 = vector.extract_strided_slice %27 {offsets = [0, 32], sizes = [1, 32], strides = [1, 1]} : vector<1x96xf32> to vector<1x32xf32>
    %71 = vector.extract_strided_slice %28 {offsets = [0, 32], sizes = [1, 32], strides = [1, 1]} : vector<1x96xf32> to vector<1x32xf32>
    %72 = vector.extract_strided_slice %29 {offsets = [0, 32], sizes = [1, 32], strides = [1, 1]} : vector<1x96xf32> to vector<1x32xf32>
    %73 = vector.broadcast %71 : vector<1x32xf32> to vector<8x32xf32>
    %74 = arith.mulf %69, %73 : vector<8x32xf32>
    %cst_26 = arith.constant dense<0.000000e+00> : vector<8xf32>
    %75 = vector.multi_reduction <add>, %74, %cst_26 [1] : vector<8x32xf32> to vector<8xf32>
    %76 = vector.shape_cast %75 : vector<8xf32> to vector<8x1xf32>
    %cst_27 = arith.constant dense<0.000000e+00> : vector<1x8xf32>
    %77 = tpu.matmul %70, %69, %cst_27 {dimension_numbers = #tpu.dot_dimension_numbers<[1], [1], [0], [0], [0, 0, 1, 0], [], []>} : vector<1x32xf32>, vector<8x32xf32>, vector<1x8xf32> -> vector<1x8xf32>
    %78 = vector.broadcast %76 : vector<8x1xf32> to vector<8x8xf32>
    %79 = vector.broadcast %77 : vector<1x8xf32> to vector<8x8xf32>
    %80 = arith.addf %78, %79 : vector<8x8xf32>
    %cst_28 = arith.constant 0.000000e+00 : f32
    %81 = vector.broadcast %cst_28 : f32 to vector<8x8xf32>
    %82 = arith.cmpf ogt, %80, %81 : vector<8x8xf32>
    %cst_29 = arith.constant 2.000000e-01 : f32
    %83 = vector.broadcast %cst_29 : f32 to vector<8x8xf32>
    %84 = arith.mulf %83, %80 : vector<8x8xf32>
    %85 = arith.select %82, %80, %84 : vector<8x8xi1>, vector<8x8xf32>
    %86 = arith.addf %85, %20 : vector<8x8xf32>
    %cst_30 = arith.constant dense<0xFF800000> : vector<8xf32>
    %87 = vector.multi_reduction <maximumf>, %86, %cst_30 [1] : vector<8x8xf32> to vector<8xf32>
    %88 = vector.shape_cast %87 : vector<8xf32> to vector<8x1xf32>
    %89 = vector.broadcast %88 : vector<8x1xf32> to vector<8x8xf32>
    %90 = arith.subf %86, %89 : vector<8x8xf32>
    %91 = math.exp %90 : vector<8x8xf32>
    %cst_31 = arith.constant dense<0.000000e+00> : vector<8xf32>
    %92 = vector.multi_reduction <add>, %91, %cst_31 [1] : vector<8x8xf32> to vector<8xf32>
    %93 = vector.shape_cast %92 : vector<8xf32> to vector<8x1xf32>
    %94 = vector.broadcast %93 : vector<8x1xf32> to vector<8x8xf32>
    %95 = arith.divf %91, %94 : vector<8x8xf32>
    %cst_32 = arith.constant dense<0.000000e+00> : vector<8x32xf32>
    %96 = tpu.matmul %95, %69, %cst_32 {dimension_numbers = #tpu.dot_dimension_numbers<[1], [0], [0], [1], [0, 0, 1, 1], [], []>} : vector<8x8xf32>, vector<8x32xf32>, vector<8x32xf32> -> vector<8x32xf32>
    %97 = vector.broadcast %72 : vector<1x32xf32> to vector<8x32xf32>
    %98 = arith.addf %96, %97 : vector<8x32xf32>
    %99 = arith.mulf %98, %98 : vector<8x32xf32>
    %cst_33 = arith.constant dense<0.000000e+00> : vector<8xf32>
    %100 = vector.multi_reduction <add>, %99, %cst_33 [1] : vector<8x32xf32> to vector<8xf32>
    %101 = vector.shape_cast %100 : vector<8xf32> to vector<8x1xf32>
    %cst_34 = arith.constant 1.000000e-24 : f32
    %102 = vector.broadcast %cst_34 : f32 to vector<8x1xf32>
    %103 = arith.maximumf %101, %102 : vector<8x1xf32>
    %104 = math.rsqrt %103 : vector<8x1xf32>
    %105 = vector.broadcast %104 : vector<8x1xf32> to vector<8x32xf32>
    %106 = arith.mulf %98, %105 : vector<8x32xf32>
    %107 = vector.extract_strided_slice %26 {offsets = [0, 64], sizes = [8, 32], strides = [1, 1]} : vector<8x96xf32> to vector<8x32xf32>
    %108 = vector.extract_strided_slice %27 {offsets = [0, 64], sizes = [1, 32], strides = [1, 1]} : vector<1x96xf32> to vector<1x32xf32>
    %109 = vector.extract_strided_slice %28 {offsets = [0, 64], sizes = [1, 32], strides = [1, 1]} : vector<1x96xf32> to vector<1x32xf32>
    %110 = vector.extract_strided_slice %29 {offsets = [0, 64], sizes = [1, 32], strides = [1, 1]} : vector<1x96xf32> to vector<1x32xf32>
    %111 = vector.broadcast %109 : vector<1x32xf32> to vector<8x32xf32>
    %112 = arith.mulf %107, %111 : vector<8x32xf32>
    %cst_35 = arith.constant dense<0.000000e+00> : vector<8xf32>
    %113 = vector.multi_reduction <add>, %112, %cst_35 [1] : vector<8x32xf32> to vector<8xf32>
    %114 = vector.shape_cast %113 : vector<8xf32> to vector<8x1xf32>
    %cst_36 = arith.constant dense<0.000000e+00> : vector<1x8xf32>
    %115 = tpu.matmul %108, %107, %cst_36 {dimension_numbers = #tpu.dot_dimension_numbers<[1], [1], [0], [0], [0, 0, 1, 0], [], []>} : vector<1x32xf32>, vector<8x32xf32>, vector<1x8xf32> -> vector<1x8xf32>
    %116 = vector.broadcast %114 : vector<8x1xf32> to vector<8x8xf32>
    %117 = vector.broadcast %115 : vector<1x8xf32> to vector<8x8xf32>
    %118 = arith.addf %116, %117 : vector<8x8xf32>
    %cst_37 = arith.constant 0.000000e+00 : f32
    %119 = vector.broadcast %cst_37 : f32 to vector<8x8xf32>
    %120 = arith.cmpf ogt, %118, %119 : vector<8x8xf32>
    %cst_38 = arith.constant 2.000000e-01 : f32
    %121 = vector.broadcast %cst_38 : f32 to vector<8x8xf32>
    %122 = arith.mulf %121, %118 : vector<8x8xf32>
    %123 = arith.select %120, %118, %122 : vector<8x8xi1>, vector<8x8xf32>
    %124 = arith.addf %123, %20 : vector<8x8xf32>
    %cst_39 = arith.constant dense<0xFF800000> : vector<8xf32>
    %125 = vector.multi_reduction <maximumf>, %124, %cst_39 [1] : vector<8x8xf32> to vector<8xf32>
    %126 = vector.shape_cast %125 : vector<8xf32> to vector<8x1xf32>
    %127 = vector.broadcast %126 : vector<8x1xf32> to vector<8x8xf32>
    %128 = arith.subf %124, %127 : vector<8x8xf32>
    %129 = math.exp %128 : vector<8x8xf32>
    %cst_40 = arith.constant dense<0.000000e+00> : vector<8xf32>
    %130 = vector.multi_reduction <add>, %129, %cst_40 [1] : vector<8x8xf32> to vector<8xf32>
    %131 = vector.shape_cast %130 : vector<8xf32> to vector<8x1xf32>
    %132 = vector.broadcast %131 : vector<8x1xf32> to vector<8x8xf32>
    %133 = arith.divf %129, %132 : vector<8x8xf32>
    %cst_41 = arith.constant dense<0.000000e+00> : vector<8x32xf32>
    %134 = tpu.matmul %133, %107, %cst_41 {dimension_numbers = #tpu.dot_dimension_numbers<[1], [0], [0], [1], [0, 0, 1, 1], [], []>} : vector<8x8xf32>, vector<8x32xf32>, vector<8x32xf32> -> vector<8x32xf32>
    %135 = vector.broadcast %110 : vector<1x32xf32> to vector<8x32xf32>
    %136 = arith.addf %134, %135 : vector<8x32xf32>
    %137 = arith.mulf %136, %136 : vector<8x32xf32>
    %cst_42 = arith.constant dense<0.000000e+00> : vector<8xf32>
    %138 = vector.multi_reduction <add>, %137, %cst_42 [1] : vector<8x32xf32> to vector<8xf32>
    %139 = vector.shape_cast %138 : vector<8xf32> to vector<8x1xf32>
    %cst_43 = arith.constant 1.000000e-24 : f32
    %140 = vector.broadcast %cst_43 : f32 to vector<8x1xf32>
    %141 = arith.maximumf %139, %140 : vector<8x1xf32>
    %142 = math.rsqrt %141 : vector<8x1xf32>
    %143 = vector.broadcast %142 : vector<8x1xf32> to vector<8x32xf32>
    %144 = arith.mulf %136, %143 : vector<8x32xf32>
    %145 = tpu.concatenate %68, %106, %144 in 1 : vector<8x32xf32>, vector<8x32xf32>, vector<8x32xf32> -> vector<8x96xf32>
    %c0_44 = arith.constant 0 : index
    %c0_45 = arith.constant 0 : index
    %146 = vector.load %arg3[%c0_44, %c0_45] : memref<96x32xf32, #tpu.memory_space<vmem>>, vector<96x32xf32>
    %cst_46 = arith.constant dense<0.000000e+00> : vector<8x32xf32>
    %147 = tpu.matmul %145, %146, %cst_46 {dimension_numbers = #tpu.dot_dimension_numbers<[1], [0], [0], [1], [0, 0, 1, 1], [], []>} : vector<8x96xf32>, vector<96x32xf32>, vector<8x32xf32> -> vector<8x32xf32>
    %148 = vector.broadcast %30 : vector<1x32xf32> to vector<8x32xf32>
    %149 = arith.addf %147, %148 : vector<8x32xf32>
    %150 = tpu.concatenate %145, %149 in 1 : vector<8x96xf32>, vector<8x32xf32> -> vector<8x128xf32>
    %c0_47 = arith.constant 0 : index
    %c0_48 = arith.constant 0 : index
    %151 = vector.load %arg5[%c0_47, %c0_48] : memref<8x128xf32, #tpu.memory_space<vmem>>, vector<8x128xf32>
    tpu.vector_store %arg5[%c0_47, %c0_48], %150 {strides = array<i32>} : memref<8x128xf32, #tpu.memory_space<vmem>>, vector<8x128xf32>,
    return
  }
}

</mosaic_0001>

<llo_original>
// kernel: mm_model_forward.1
$region0: #{mm_model_forward.1}
  #allocation0 [shape = 'u32[]', space=smem, size = 0x4, offset = 0x4, fixed_abs, tag = 'smem constant byte address 0x4 - core index']
  #allocation1 [shape = 'u32[144,128]{1,0:T(1,128)}', space=vmem, size = 0x12000, scoped, tag = 'internal scratch']
  %s0 = inlined_call_operand.vmem [shape: s32[2,16], index: 0, kind: input, shape index: {}]
  %s1 = inlined_call_operand.vmem [shape: f32[8,144], index: 1, kind: input, shape index: {}]
  %s2 = inlined_call_operand.vmem [shape: f32[144,96], index: 2, kind: input, shape index: {}]
  %s3 = inlined_call_operand.vmem [shape: f32[96,32], index: 3, kind: input, shape index: {}]
  %s4 = inlined_call_operand.vmem [shape: f32[5,96], index: 4, kind: input, shape index: {}]
  %s5 = inlined_call_operand.vmem [shape: f32[8,128], index: 5, kind: output, shape index: {}]
  %s6 = sld [smem:[#allocation0]]
  $region30: #{mm_model_forward.1} parent=0
    _
  %s8 = ssub.s32 1, %s6
  %s9 = scalar_select 0, %s8, %s6
  // Predicated region
  $region2: #{mm_model_forward.1} parent=0 // pred_check
    _
  $region3: #{mm_model_forward.1} parent=0 // pred_check_branch
    %11 = sbr.rel (0) target = $region5
  $region4: #{mm_model_forward.1} parent=0 // pred_region
    _
  $region5: #{mm_model_forward.1} parent=0 // pred_fallthru
    _
  // Predicated region
  $region6: #{mm_model_forward.1} parent=0 // pred_check
    _
  $region7: #{mm_model_forward.1} parent=0 // pred_check_branch
    %13 = sbr.rel (0) target = $region9
  $region8: #{mm_model_forward.1} parent=0 // pred_region
    _
  $region9: #{mm_model_forward.1} parent=0 // pred_fallthru
    _
  // Predicated region
  $region10: #{mm_model_forward.1} parent=0 // pred_check
    _
  $region11: #{mm_model_forward.1} parent=0 // pred_check_branch
    %15 = sbr.rel (0) target = $region13
  $region12: #{mm_model_forward.1} parent=0 // pred_region
    _
  $region13: #{mm_model_forward.1} parent=0 // pred_fallthru
    _
  // Predicated region
  $region14: #{mm_model_forward.1} parent=0 // pred_check
    _
  $region15: #{mm_model_forward.1} parent=0 // pred_check_branch
    %17 = sbr.rel (0) target = $region17
  $region16: #{mm_model_forward.1} parent=0 // pred_region
    _
  $region17: #{mm_model_forward.1} parent=0 // pred_fallthru
    _
  // Predicated region
  $region18: #{mm_model_forward.1} parent=0 // pred_check
    _
  $region19: #{mm_model_forward.1} parent=0 // pred_check_branch
    %19 = sbr.rel (0) target = $region21
  $region20: #{mm_model_forward.1} parent=0 // pred_region
    _
  $region21: #{mm_model_forward.1} parent=0 // pred_fallthru
    _
  %v20 = vlaneseq
  %v21 = vshrl.u32 %v20, 7
  %v22 = vld [vmem:[%s0] sm:$0x1]
  %v23 = vlaneseq
  %v24 = vshrl.u32 %v23, 7
  %v25 = vsub.s32 0, %v24
  %v26 = vrot.slane %v22, %v25
  %vm27 = vcmp.eq.s32.totalorder %v21, %v26
  %v28 = vsel %vm27, 1, 0
  %v29 = vcvt.s32.f32 %v28
  %v30 = vld [vmem:[%s0 + $0x1] sm:$0x1]
  %v31 = vlaneseq
  %v32 = vshrl.u32 %v31, 7
  %v33 = vsub.s32 0, %v32
  %v34 = vrot.slane %v30, %v33
  %vm35 = vcmp.eq.s32.totalorder %v21, %v34
  %v36 = vsel %vm35, 1, 0
  %v37 = vcvt.s32.f32 %v36
  %vm38 = vcmask 130048
  %v40 = vsel %vm38, %v37, 0
  %v43 = vsel %vm38, %v29, 0
  %45 = vmatprep.subr.mxu0 0.0
  %46 = vmatpush1.xpose.msra.mxu0 %v43
  %47 = vmatprep.subr.mxu0 0.0
  %48 = vmatpush1.xpose.msra.mxu0 0.0
  %49 = vmatprep.subr.mxu0 0.0
  %50 = vmatpush1.xpose.msra.mxu0 0.0
  %51 = vmatprep.subr.mxu0 0.0
  %52 = vmatpush1.xpose.msra.mxu0 0.0
  %53 = vmatprep.subr.mxu0 0.0
  %54 = vmatpush1.xpose.msra.mxu0 0.0
  %55 = vmatprep.subr.mxu0 0.0
  %56 = vmatpush1.xpose.msra.mxu0 0.0
  %57 = vmatprep.subr.mxu0 0.0
  %58 = vmatpush1.xpose.msra.mxu0 0.0
  %59 = vmatprep.subr.mxu0 0.0
  %60 = vmatpush1.xpose.msra.mxu0 0.0
  %61 = vmatprep.subr.mxu0 0.0
  %62 = vmatpush1.xpose.msra.mxu0 0.0
  %63 = vmatprep.subr.mxu0 0.0
  %64 = vmatpush1.xpose.msra.mxu0 0.0
  %65 = vmatprep.subr.mxu0 0.0
  %66 = vmatpush1.xpose.msra.mxu0 0.0
  %67 = vmatprep.subr.mxu0 0.0
  %68 = vmatpush1.xpose.msra.mxu0 0.0
  %69 = vmatprep.subr.mxu0 0.0
  %70 = vmatpush1.xpose.msra.mxu0 0.0
  %71 = vmatprep.subr.mxu0 0.0
  %72 = vmatpush1.xpose.msra.mxu0 0.0
  %73 = vmatprep.subr.mxu0 0.0
  %74 = vmatpush1.xpose.msra.mxu0 0.0
  %75 = vmatprep.subr.mxu0 0.0
  %76 = vmatpush1.xpose.msra.mxu0 0.0
  %77 = vmatprep.subr.mxu0 0.0
  %78 = vmatpush1.xpose.msra.mxu0 0.0
  %79 = vmatprep.subr.mxu0 0.0
  %80 = vmatpush1.xpose.msra.mxu0 0.0
  %81 = vmatprep.subr.mxu0 0.0
  %82 = vmatpush1.xpose.msra.mxu0 0.0
  %83 = vmatprep.subr.mxu0 0.0
  %84 = vmatpush1.xpose.msra.mxu0 0.0
  %85 = vmatprep.subr.mxu0 0.0
  %86 = vmatpush1.xpose.msra.mxu0 0.0
  %87 = vmatprep.subr.mxu0 0.0
  %88 = vmatpush1.xpose.msra.mxu0 0.0
  %89 = vmatprep.subr.mxu0 0.0
  %90 = vmatpush1.xpose.msra.mxu0 0.0
  %91 = vmatprep.subr.mxu0 0.0
  %92 = vmatpush1.xpose.msra.mxu0 0.0
  %93 = vmatprep.subr.mxu0 0.0
  %94 = vmatpush1.xpose.msra.mxu0 0.0
  %95 = vmatprep.subr.mxu0 0.0
  %96 = vmatpush1.xpose.msra.mxu0 0.0
  %97 = vmatprep.subr.mxu0 0.0
  %98 = vmatpush1.xpose.msra.mxu0 0.0
  %99 = vmatprep.subr.mxu0 0.0
  %100 = vmatpush1.xpose.msra.mxu0 0.0
  %101 = vmatprep.subr.mxu0 0.0
  %102 = vmatpush1.xpose.msra.mxu0 0.0
  %103 = vmatprep.subr.mxu0 0.0
  %104 = vmatpush1.xpose.msra.mxu0 0.0
  %105 = vmatprep.subr.mxu0 0.0
  %106 = vmatpush1.xpose.msra.mxu0 0.0
  %107 = vmatprep.subr.mxu0 0.0
  %108 = vmatpush1.xpose.msra.mxu0 0.0
  %109 = vmatprep.mubr.f32.mxu0 0.0
  %110 = vmatmul.mubr.f32.gmra.mrb[0].mxu0 %v40
  %v111 = vpop.f32.mrb[0].mxu0
  %v112 = vadd.f32 0.0, %v111
  %v113 = vpop.f32.mrb[0].mxu0
  %114 = vdwg.mxu0
  %v115 = vlaneseq
  %v116 = vand.u32 %v115, 127
  %vm117 = vcmp.gt.f32.partialorder %v112, 0.5
  %vm118 = vcmp.eq.s32.totalorder %v21, %v116
  %vm119 = vmor %vm117, %vm118
  %v120 = vsel %vm119, 0.0, -1e+30
  %v121 = vld [vmem:[%s1] sm:$0xff]
  %v122 = vld [vmem:[%s1 + $0x8] sm:$0xff]
  %v123 = vld [vmem:[%s2] sm:$0xff]
  %v124 = vld [vmem:[%s2 + $0x8] sm:$0xff]
  %v125 = vld [vmem:[%s2 + $0x10] sm:$0xff]
  %v126 = vld [vmem:[%s2 + $0x18] sm:$0xff]
  %v127 = vld [vmem:[%s2 + $0x20] sm:$0xff]
  %v128 = vld [vmem:[%s2 + $0x28] sm:$0xff]
  %v129 = vld [vmem:[%s2 + $0x30] sm:$0xff]
  %v130 = vld [vmem:[%s2 + $0x38] sm:$0xff]
  %v131 = vld [vmem:[%s2 + $0x40] sm:$0xff]
  %v132 = vld [vmem:[%s2 + $0x48] sm:$0xff]
  %v133 = vld [vmem:[%s2 + $0x50] sm:$0xff]
  %v134 = vld [vmem:[%s2 + $0x58] sm:$0xff]
  %v135 = vld [vmem:[%s2 + $0x60] sm:$0xff]
  %v136 = vld [vmem:[%s2 + $0x68] sm:$0xff]
  %v137 = vld [vmem:[%s2 + $0x70] sm:$0xff]
  %v138 = vld [vmem:[%s2 + $0x78] sm:$0xff]
  %v139 = vld [vmem:[%s2 + $0x80] sm:$0xff]
  %v140 = vld [vmem:[%s2 + $0x88] sm:$0xff]
  %v141 = vld [vmem:[%s4] sm:$0x1]
  %v142 = vlaneseq
  %v143 = vshrl.u32 %v142, 7
  %v144 = vsub.s32 0, %v143
  %v145 = vrot.slane %v141, %v144
  %v147 = vsel %vm38, %v122, 0
  %149 = vmatprep.subr.mxu0 0.0
  %150 = vmatpush1.msra.mxu0 %v123
  %151 = vmatprep.subr.mxu0 0.0
  %152 = vmatpush1.msra.mxu0 %v124
  %153 = vmatprep.subr.mxu0 0.0
  %154 = vmatpush1.msra.mxu0 %v125
  %155 = vmatprep.subr.mxu0 0.0
  %156 = vmatpush1.msra.mxu0 %v126
  %157 = vmatprep.subr.mxu0 0.0
  %158 = vmatpush1.msra.mxu0 %v127
  %159 = vmatprep.subr.mxu0 0.0
  %160 = vmatpush1.msra.mxu0 %v128
  %161 = vmatprep.subr.mxu0 0.0
  %162 = vmatpush1.msra.mxu0 %v129
  %163 = vmatprep.subr.mxu0 0.0
  %164 = vmatpush1.msra.mxu0 %v130
  %165 = vmatprep.subr.mxu0 0.0
  %166 = vmatpush1.msra.mxu0 %v131
  %167 = vmatprep.subr.mxu0 0.0
  %168 = vmatpush1.msra.mxu0 %v132
  %169 = vmatprep.subr.mxu0 0.0
  %170 = vmatpush1.msra.mxu0 %v133
  %171 = vmatprep.subr.mxu0 0.0
  %172 = vmatpush1.msra.mxu0 %v134
  %173 = vmatprep.subr.mxu0 0.0
  %174 = vmatpush1.msra.mxu0 %v135
  %175 = vmatprep.subr.mxu0 0.0
  %176 = vmatpush1.msra.mxu0 %v136
  %177 = vmatprep.subr.mxu0 0.0
  %178 = vmatpush1.msra.mxu0 %v137
  %179 = vmatprep.subr.mxu0 0.0
  %180 = vmatpush1.msra.mxu0 %v138
  %181 = vmatprep.subr.mxu0 0.0
  %182 = vmatpush1.msra.mxu0 %v139
  %183 = vmatprep.subr.mxu0 0.0
  %184 = vmatpush1.msra.mxu0 %v140
  %185 = vmatprep.subr.mxu0 0.0
  %186 = vmatpush1.msra.mxu0 0.0
  %187 = vmatprep.subr.mxu0 0.0
  %188 = vmatpush1.msra.mxu0 0.0
  %189 = vmatprep.subr.mxu0 0.0
  %190 = vmatpush1.msra.mxu0 0.0
  %191 = vmatprep.subr.mxu0 0.0
  %192 = vmatpush1.msra.mxu0 0.0
  %193 = vmatprep.subr.mxu0 0.0
  %194 = vmatpush1.msra.mxu0 0.0
  %195 = vmatprep.subr.mxu0 0.0
  %196 = vmatpush1.msra.mxu0 0.0
  %197 = vmatprep.subr.mxu0 0.0
  %198 = vmatpush1.msra.mxu0 0.0
  %199 = vmatprep.subr.mxu0 0.0
  %200 = vmatpush1.msra.mxu0 0.0
  %201 = vmatprep.subr.mxu0 0.0
  %202 = vmatpush1.msra.mxu0 0.0
  %203 = vmatprep.subr.mxu0 0.0
  %204 = vmatpush1.msra.mxu0 0.0
  %205 = vmatprep.subr.mxu0 0.0
  %206 = vmatpush1.msra.mxu0 0.0
  %207 = vmatprep.subr.mxu0 0.0
  %208 = vmatpush1.msra.mxu0 0.0
  %209 = vmatprep.subr.mxu0 0.0
  %210 = vmatpush1.msra.mxu0 0.0
  %211 = vmatprep.subr.mxu0 0.0
  %212 = vmatpush1.msra.mxu0 0.0
  %213 = vmatprep.mubr.f32.mxu0 %v147
  %214 = vmatmul.mubr.f32.gmra.mrb[0].mxu0 %v121
  %v215 = vpop.f32.mrb[0].mxu0
  %v216 = vadd.f32 %v145, %v215
  %v217 = vpop.f32.mrb[0].mxu0
  %218 = vdwg.mxu0
  %v219 = vld [vmem:[%s4 + $0x1] sm:$0x1]
  %v220 = vld [vmem:[%s4 + $0x2] sm:$0x1]
  %v221 = vld [vmem:[%s4 + $0x3] sm:$0x1]
  %v222 = vld [vmem:[%s4 + $0x4] sm:$0x1]
  %v223 = vlaneseq
  %v224 = vshrl.u32 %v223, 7
  %v225 = vsub.s32 0, %v224
  %v226 = vrot.slane %v220, %v225
  %v227 = vmul.f32 %v216, %v226
  %vm228 = vcmask 261120
  %v229 = vsel %vm228, %v227, 0.0
  %230 = vadd.xlane.f32.xlu0 %v229
  %v231 = vpop.xlane.xlu0 %230
  %v233 = vsel %vm228, %v219, 0
  %v236 = vsel %vm228, %v216, 0
  %238 = vmatprep.subr.mxu0 0.0
  %239 = vmatpush1.xpose.msra.mxu0 %v236
  %240 = vmatprep.subr.mxu0 0.0
  %241 = vmatpush1.xpose.msra.mxu0 0.0
  %242 = vmatprep.subr.mxu0 0.0
  %243 = vmatpush1.xpose.msra.mxu0 0.0
  %244 = vmatprep.subr.mxu0 0.0
  %245 = vmatpush1.xpose.msra.mxu0 0.0
  %246 = vmatprep.subr.mxu0 0.0
  %247 = vmatpush1.xpose.msra.mxu0 0.0
  %248 = vmatprep.subr.mxu0 0.0
  %249 = vmatpush1.xpose.msra.mxu0 0.0
  %250 = vmatprep.subr.mxu0 0.0
  %251 = vmatpush1.xpose.msra.mxu0 0.0
  %252 = vmatprep.subr.mxu0 0.0
  %253 = vmatpush1.xpose.msra.mxu0 0.0
  %254 = vmatprep.subr.mxu0 0.0
  %255 = vmatpush1.xpose.msra.mxu0 0.0
  %256 = vmatprep.subr.mxu0 0.0
  %257 = vmatpush1.xpose.msra.mxu0 0.0
  %258 = vmatprep.subr.mxu0 0.0
  %259 = vmatpush1.xpose.msra.mxu0 0.0
  %260 = vmatprep.subr.mxu0 0.0
  %261 = vmatpush1.xpose.msra.mxu0 0.0
  %262 = vmatprep.subr.mxu0 0.0
  %263 = vmatpush1.xpose.msra.mxu0 0.0
  %264 = vmatprep.subr.mxu0 0.0
  %265 = vmatpush1.xpose.msra.mxu0 0.0
  %266 = vmatprep.subr.mxu0 0.0
  %267 = vmatpush1.xpose.msra.mxu0 0.0
  %268 = vmatprep.subr.mxu0 0.0
  %269 = vmatpush1.xpose.msra.mxu0 0.0
  %270 = vmatprep.subr.mxu0 0.0
  %271 = vmatpush1.xpose.msra.mxu0 0.0
  %272 = vmatprep.subr.mxu0 0.0
  %273 = vmatpush1.xpose.msra.mxu0 0.0
  %274 = vmatprep.subr.mxu0 0.0
  %275 = vmatpush1.xpose.msra.mxu0 0.0
  %276 = vmatprep.subr.mxu0 0.0
  %277 = vmatpush1.xpose.msra.mxu0 0.0
  %278 = vmatprep.subr.mxu0 0.0
  %279 = vmatpush1.xpose.msra.mxu0 0.0
  %280 = vmatprep.subr.mxu0 0.0
  %281 = vmatpush1.xpose.msra.mxu0 0.0
  %282 = vmatprep.subr.mxu0 0.0
  %283 = vmatpush1.xpose.msra.mxu0 0.0
  %284 = vmatprep.subr.mxu0 0.0
  %285 = vmatpush1.xpose.msra.mxu0 0.0
  %286 = vmatprep.subr.mxu0 0.0
  %287 = vmatpush1.xpose.msra.mxu0 0.0
  %288 = vmatprep.subr.mxu0 0.0
  %289 = vmatpush1.xpose.msra.mxu0 0.0
  %290 = vmatprep.subr.mxu0 0.0
  %291 = vmatpush1.xpose.msra.mxu0 0.0
  %292 = vmatprep.subr.mxu0 0.0
  %293 = vmatpush1.xpose.msra.mxu0 0.0
  %294 = vmatprep.subr.mxu0 0.0
  %295 = vmatpush1.xpose.msra.mxu0 0.0
  %296 = vmatprep.subr.mxu0 0.0
  %297 = vmatpush1.xpose.msra.mxu0 0.0
  %298 = vmatprep.subr.mxu0 0.0
  %299 = vmatpush1.xpose.msra.mxu0 0.0
  %300 = vmatprep.subr.mxu0 0.0
  %301 = vmatpush1.xpose.msra.mxu0 0.0
  %302 = vmatprep.mubr.f32.mxu0 0.0
  %303 = vmatmul.mubr.f32.gmra.mrb[0].mxu0 %v233
  %v304 = vpop.f32.mrb[0].mxu0
  %v305 = vadd.f32 0.0, %v304
  %v306 = vpop.f32.mrb[0].mxu0
  %307 = vdwg.mxu0
  %v308 = vlaneseq
  %v309 = vshrl.u32 %v308, 7
  %v310 = vsub.s32 0, %v309
  %v311 = vrot.slane %v305, %v310
  %v312 = vadd.f32 %v231, %v311
  %vm313 = vcmp.gt.f32.partialorder %v312, 0.0
  %v314 = vmul.f32 %v312, 0.2
  %v315 = vsel %vm313, %v312, %v314
  %v316 = vadd.f32 %v315, %v120
  %vm317 = vcmask 64512
  %v318 = vsel %vm317, %v316, -inf
  %319 = vmax.xlane.f32.xlu0 %v318
  %v320 = vpop.xlane.xlu0 %319
  %v321 = vsub.f32 %v316, %v320
  %v322 = vmul.f32 %v321, 1.442695
  %v323 = vpow.pop %v322
  %v324 = vsel %vm317, %v323, 0.0
  %325 = vadd.xlane.f32.xlu0 %v324
  %v326 = vpop.xlane.xlu0 %325
  %v327 = vrcp.pop %v326
  %v328 = vmul.f32 %v323, %v327
  %v329 = vlaneseq
  %v330 = vshrl.u32 %v329, 7
  %v331 = vsub.s32 0, %v330
  %v332 = vrot.slane %v221, %v331
  %v334 = vsel %vm317, %v328, 0
  %336 = vmatprep.subr.mxu0 0.0
  %337 = vmatpush1.msra.mxu0 %v216
  %338 = vmatprep.subr.mxu0 0.0
  %339 = vmatpush1.msra.mxu0 0.0
  %340 = vmatprep.subr.mxu0 0.0
  %341 = vmatpush1.msra.mxu0 0.0
  %342 = vmatprep.subr.mxu0 0.0
  %343 = vmatpush1.msra.mxu0 0.0
  %344 = vmatprep.subr.mxu0 0.0
  %345 = vmatpush1.msra.mxu0 0.0
  %346 = vmatprep.subr.mxu0 0.0
  %347 = vmatpush1.msra.mxu0 0.0
  %348 = vmatprep.subr.mxu0 0.0
  %349 = vmatpush1.msra.mxu0 0.0
  %350 = vmatprep.subr.mxu0 0.0
  %351 = vmatpush1.msra.mxu0 0.0
  %352 = vmatprep.subr.mxu0 0.0
  %353 = vmatpush1.msra.mxu0 0.0
  %354 = vmatprep.subr.mxu0 0.0
  %355 = vmatpush1.msra.mxu0 0.0
  %356 = vmatprep.subr.mxu0 0.0
  %357 = vmatpush1.msra.mxu0 0.0
  %358 = vmatprep.subr.mxu0 0.0
  %359 = vmatpush1.msra.mxu0 0.0
  %360 = vmatprep.subr.mxu0 0.0
  %361 = vmatpush1.msra.mxu0 0.0
  %362 = vmatprep.subr.mxu0 0.0
  %363 = vmatpush1.msra.mxu0 0.0
  %364 = vmatprep.subr.mxu0 0.0
  %365 = vmatpush1.msra.mxu0 0.0
  %366 = vmatprep.subr.mxu0 0.0
  %367 = vmatpush1.msra.mxu0 0.0
  %368 = vmatprep.subr.mxu0 0.0
  %369 = vmatpush1.msra.mxu0 0.0
  %370 = vmatprep.subr.mxu0 0.0
  %371 = vmatpush1.msra.mxu0 0.0
  %372 = vmatprep.subr.mxu0 0.0
  %373 = vmatpush1.msra.mxu0 0.0
  %374 = vmatprep.subr.mxu0 0.0
  %375 = vmatpush1.msra.mxu0 0.0
  %376 = vmatprep.subr.mxu0 0.0
  %377 = vmatpush1.msra.mxu0 0.0
  %378 = vmatprep.subr.mxu0 0.0
  %379 = vmatpush1.msra.mxu0 0.0
  %380 = vmatprep.subr.mxu0 0.0
  %381 = vmatpush1.msra.mxu0 0.0
  %382 = vmatprep.subr.mxu0 0.0
  %383 = vmatpush1.msra.mxu0 0.0
  %384 = vmatprep.subr.mxu0 0.0
  %385 = vmatpush1.msra.mxu0 0.0
  %386 = vmatprep.subr.mxu0 0.0
  %387 = vmatpush1.msra.mxu0 0.0
  %388 = vmatprep.subr.mxu0 0.0
  %389 = vmatpush1.msra.mxu0 0.0
  %390 = vmatprep.subr.mxu0 0.0
  %391 = vmatpush1.msra.mxu0 0.0
  %392 = vmatprep.subr.mxu0 0.0
  %393 = vmatpush1.msra.mxu0 0.0
  %394 = vmatprep.subr.mxu0 0.0
  %395 = vmatpush1.msra.mxu0 0.0
  %396 = vmatprep.subr.mxu0 0.0
  %397 = vmatpush1.msra.mxu0 0.0
  %398 = vmatprep.subr.mxu0 0.0
  %399 = vmatpush1.msra.mxu0 0.0
  %400 = vmatprep.mubr.f32.mxu0 0.0
  %401 = vmatmul.mubr.f32.gmra.mrb[0].mxu0 %v334
  %v402 = vpop.f32.mrb[0].mxu0
  %v403 = vadd.f32 %v332, %v402
  %v404 = vpop.f32.mrb[0].mxu0
  %405 = vdwg.mxu0
  %v406 = vmul.f32 %v403, %v403
  %v407 = vsel %vm228, %v406, 0.0
  %408 = vadd.xlane.f32.xlu0 %v407
  %v409 = vpop.xlane.xlu0 %408
  %v410 = vmax.f32 %v409, 1e-24
  %v411 = vrsqrt.pop %v410
  %v412 = vmul.f32 %v403, %v411
  %414 = vrot.lane.b32.xlu0 %v227, 96
  %v415 = vpop.permute.xlu0 %414
  %v417 = vsel %vm228, %v415, 0.0
  %418 = vadd.xlane.f32.xlu0 %v417
  %v419 = vpop.xlane.xlu0 %418
  %420 = vrot.lane.b32.xlu0 %v219, 96
  %v421 = vpop.permute.xlu0 %420
  %422 = vrot.lane.b32.xlu0 %v216, 96
  %v423 = vpop.permute.xlu0 %422
  %v424 = vsel %vm228, %v421, 0
  %v426 = vsel %vm228, %v423, 0
  %428 = vmatprep.subr.mxu0 0.0
  %429 = vmatpush1.xpose.msra.mxu0 %v426
  %430 = vmatprep.subr.mxu0 0.0
  %431 = vmatpush1.xpose.msra.mxu0 0.0
  %432 = vmatprep.subr.mxu0 0.0
  %433 = vmatpush1.xpose.msra.mxu0 0.0
  %434 = vmatprep.subr.mxu0 0.0
  %435 = vmatpush1.xpose.msra.mxu0 0.0
  %436 = vmatprep.subr.mxu0 0.0
  %437 = vmatpush1.xpose.msra.mxu0 0.0
  %438 = vmatprep.subr.mxu0 0.0
  %439 = vmatpush1.xpose.msra.mxu0 0.0
  %440 = vmatprep.subr.mxu0 0.0
  %441 = vmatpush1.xpose.msra.mxu0 0.0
  %442 = vmatprep.subr.mxu0 0.0
  %443 = vmatpush1.xpose.msra.mxu0 0.0
  %444 = vmatprep.subr.mxu0 0.0
  %445 = vmatpush1.xpose.msra.mxu0 0.0
  %446 = vmatprep.subr.mxu0 0.0
  %447 = vmatpush1.xpose.msra.mxu0 0.0
  %448 = vmatprep.subr.mxu0 0.0
  %449 = vmatpush1.xpose.msra.mxu0 0.0
  %450 = vmatprep.subr.mxu0 0.0
  %451 = vmatpush1.xpose.msra.mxu0 0.0
  %452 = vmatprep.subr.mxu0 0.0
  %453 = vmatpush1.xpose.msra.mxu0 0.0
  %454 = vmatprep.subr.mxu0 0.0
  %455 = vmatpush1.xpose.msra.mxu0 0.0
  %456 = vmatprep.subr.mxu0 0.0
  %457 = vmatpush1.xpose.msra.mxu0 0.0
  %458 = vmatprep.subr.mxu0 0.0
  %459 = vmatpush1.xpose.msra.mxu0 0.0
  %460 = vmatprep.subr.mxu0 0.0
  %461 = vmatpush1.xpose.msra.mxu0 0.0
  %462 = vmatprep.subr.mxu0 0.0
  %463 = vmatpush1.xpose.msra.mxu0 0.0
  %464 = vmatprep.subr.mxu0 0.0
  %465 = vmatpush1.xpose.msra.mxu0 0.0
  %466 = vmatprep.subr.mxu0 0.0
  %467 = vmatpush1.xpose.msra.mxu0 0.0
  %468 = vmatprep.subr.mxu0 0.0
  %469 = vmatpush1.xpose.msra.mxu0 0.0
  %470 = vmatprep.subr.mxu0 0.0
  %471 = vmatpush1.xpose.msra.mxu0 0.0
  %472 = vmatprep.subr.mxu0 0.0
  %473 = vmatpush1.xpose.msra.mxu0 0.0
  %474 = vmatprep.subr.mxu0 0.0
  %475 = vmatpush1.xpose.msra.mxu0 0.0
  %476 = vmatprep.subr.mxu0 0.0
  %477 = vmatpush1.xpose.msra.mxu0 0.0
  %478 = vmatprep.subr.mxu0 0.0
  %479 = vmatpush1.xpose.msra.mxu0 0.0
  %480 = vmatprep.subr.mxu0 0.0
  %481 = vmatpush1.xpose.msra.mxu0 0.0
  %482 = vmatprep.subr.mxu0 0.0
  %483 = vmatpush1.xpose.msra.mxu0 0.0
  %484 = vmatprep.subr.mxu0 0.0
  %485 = vmatpush1.xpose.msra.mxu0 0.0
  %486 = vmatprep.subr.mxu0 0.0
  %487 = vmatpush1.xpose.msra.mxu0 0.0
  %488 = vmatprep.subr.mxu0 0.0
  %489 = vmatpush1.xpose.msra.mxu0 0.0
  %490 = vmatprep.subr.mxu0 0.0
  %491 = vmatpush1.xpose.msra.mxu0 0.0
  %492 = vmatprep.mubr.f32.mxu0 0.0
  %493 = vmatmul.mubr.f32.gmra.mrb[0].mxu0 %v424
  %v494 = vpop.f32.mrb[0].mxu0
  %v495 = vadd.f32 0.0, %v494
  %v496 = vpop.f32.mrb[0].mxu0
  %497 = vdwg.mxu0
  %v498 = vlaneseq
  %v499 = vshrl.u32 %v498, 7
  %v500 = vsub.s32 0, %v499
  %v501 = vrot.slane %v495, %v500
  %v502 = vadd.f32 %v419, %v501
  %vm503 = vcmp.gt.f32.partialorder %v502, 0.0
  %v504 = vmul.f32 %v502, 0.2
  %v505 = vsel %vm503, %v502, %v504
  %v506 = vadd.f32 %v505, %v120
  %v507 = vsel %vm317, %v506, -inf
  %508 = vmax.xlane.f32.xlu0 %v507
  %v509 = vpop.xlane.xlu0 %508
  %v510 = vsub.f32 %v506, %v509
  %v511 = vmul.f32 %v510, 1.442695
  %v512 = vpow.pop %v511
  %v513 = vsel %vm317, %v512, 0.0
  %514 = vadd.xlane.f32.xlu0 %v513
  %v515 = vpop.xlane.xlu0 %514
  %v516 = vrcp.pop %v515
  %v517 = vmul.f32 %v512, %v516
  %520 = vrot.lane.b32.xlu0 %v332, 96
  %v521 = vpop.permute.xlu0 %520
  %v524 = vsel %vm317, %v517, 0
  %526 = vmatprep.subr.mxu0 0.0
  %527 = vmatpush1.msra.mxu0 %v423
  %528 = vmatprep.subr.mxu0 0.0
  %529 = vmatpush1.msra.mxu0 0.0
  %530 = vmatprep.subr.mxu0 0.0
  %531 = vmatpush1.msra.mxu0 0.0
  %532 = vmatprep.subr.mxu0 0.0
  %533 = vmatpush1.msra.mxu0 0.0
  %534 = vmatprep.subr.mxu0 0.0
  %535 = vmatpush1.msra.mxu0 0.0
  %536 = vmatprep.subr.mxu0 0.0
  %537 = vmatpush1.msra.mxu0 0.0
  %538 = vmatprep.subr.mxu0 0.0
  %539 = vmatpush1.msra.mxu0 0.0
  %540 = vmatprep.subr.mxu0 0.0
  %541 = vmatpush1.msra.mxu0 0.0
  %542 = vmatprep.subr.mxu0 0.0
  %543 = vmatpush1.msra.mxu0 0.0
  %544 = vmatprep.subr.mxu0 0.0
  %545 = vmatpush1.msra.mxu0 0.0
  %546 = vmatprep.subr.mxu0 0.0
  %547 = vmatpush1.msra.mxu0 0.0
  %548 = vmatprep.subr.mxu0 0.0
  %549 = vmatpush1.msra.mxu0 0.0
  %550 = vmatprep.subr.mxu0 0.0
  %551 = vmatpush1.msra.mxu0 0.0
  %552 = vmatprep.subr.mxu0 0.0
  %553 = vmatpush1.msra.mxu0 0.0
  %554 = vmatprep.subr.mxu0 0.0
  %555 = vmatpush1.msra.mxu0 0.0
  %556 = vmatprep.subr.mxu0 0.0
  %557 = vmatpush1.msra.mxu0 0.0
  %558 = vmatprep.subr.mxu0 0.0
  %559 = vmatpush1.msra.mxu0 0.0
  %560 = vmatprep.subr.mxu0 0.0
  %561 = vmatpush1.msra.mxu0 0.0
  %562 = vmatprep.subr.mxu0 0.0
  %563 = vmatpush1.msra.mxu0 0.0
  %564 = vmatprep.subr.mxu0 0.0
  %565 = vmatpush1.msra.mxu0 0.0
  %566 = vmatprep.subr.mxu0 0.0
  %567 = vmatpush1.msra.mxu0 0.0
  %568 = vmatprep.subr.mxu0 0.0
  %569 = vmatpush1.msra.mxu0 0.0
  %570 = vmatprep.subr.mxu0 0.0
  %571 = vmatpush1.msra.mxu0 0.0
  %572 = vmatprep.subr.mxu0 0.0
  %573 = vmatpush1.msra.mxu0 0.0
  %574 = vmatprep.subr.mxu0 0.0
  %575 = vmatpush1.msra.mxu0 0.0
  %576 = vmatprep.subr.mxu0 0.0
  %577 = vmatpush1.msra.mxu0 0.0
  %578 = vmatprep.subr.mxu0 0.0
  %579 = vmatpush1.msra.mxu0 0.0
  %580 = vmatprep.subr.mxu0 0.0
  %581 = vmatpush1.msra.mxu0 0.0
  %582 = vmatprep.subr.mxu0 0.0
  %583 = vmatpush1.msra.mxu0 0.0
  %584 = vmatprep.subr.mxu0 0.0
  %585 = vmatpush1.msra.mxu0 0.0
  %586 = vmatprep.subr.mxu0 0.0
  %587 = vmatpush1.msra.mxu0 0.0
  %588 = vmatprep.subr.mxu0 0.0
  %589 = vmatpush1.msra.mxu0 0.0
  %590 = vmatprep.mubr.f32.mxu0 0.0
  %591 = vmatmul.mubr.f32.gmra.mrb[0].mxu0 %v524
  %v592 = vpop.f32.mrb[0].mxu0
  %v593 = vadd.f32 %v521, %v592
  %v594 = vpop.f32.mrb[0].mxu0
  %595 = vdwg.mxu0
  %v596 = vmul.f32 %v593, %v593
  %v597 = vsel %vm228, %v596, 0.0
  %598 = vadd.xlane.f32.xlu0 %v597
  %v599 = vpop.xlane.xlu0 %598
  %v600 = vmax.f32 %v599, 1e-24
  %v601 = vrsqrt.pop %v600
  %v602 = vmul.f32 %v593, %v601
  %603 = vrot.lane.b32.xlu0 %v227, 64
  %v604 = vpop.permute.xlu0 %603
  %v606 = vsel %vm228, %v604, 0.0
  %607 = vadd.xlane.f32.xlu0 %v606
  %v608 = vpop.xlane.xlu0 %607
  %609 = vrot.lane.b32.xlu0 %v219, 64
  %v610 = vpop.permute.xlu0 %609
  %611 = vrot.lane.b32.xlu0 %v216, 64
  %v612 = vpop.permute.xlu0 %611
  %v613 = vsel %vm228, %v610, 0
  %v615 = vsel %vm228, %v612, 0
  %617 = vmatprep.subr.mxu0 0.0
  %618 = vmatpush1.xpose.msra.mxu0 %v615
  %619 = vmatprep.subr.mxu0 0.0
  %620 = vmatpush1.xpose.msra.mxu0 0.0
  %621 = vmatprep.subr.mxu0 0.0
  %622 = vmatpush1.xpose.msra.mxu0 0.0
  %623 = vmatprep.subr.mxu0 0.0
  %624 = vmatpush1.xpose.msra.mxu0 0.0
  %625 = vmatprep.subr.mxu0 0.0
  %626 = vmatpush1.xpose.msra.mxu0 0.0
  %627 = vmatprep.subr.mxu0 0.0
  %628 = vmatpush1.xpose.msra.mxu0 0.0
  %629 = vmatprep.subr.mxu0 0.0
  %630 = vmatpush1.xpose.msra.mxu0 0.0
  %631 = vmatprep.subr.mxu0 0.0
  %632 = vmatpush1.xpose.msra.mxu0 0.0
  %633 = vmatprep.subr.mxu0 0.0
  %634 = vmatpush1.xpose.msra.mxu0 0.0
  %635 = vmatprep.subr.mxu0 0.0
  %636 = vmatpush1.xpose.msra.mxu0 0.0
  %637 = vmatprep.subr.mxu0 0.0
  %638 = vmatpush1.xpose.msra.mxu0 0.0
  %639 = vmatprep.subr.mxu0 0.0
  %640 = vmatpush1.xpose.msra.mxu0 0.0
  %641 = vmatprep.subr.mxu0 0.0
  %642 = vmatpush1.xpose.msra.mxu0 0.0
  %643 = vmatprep.subr.mxu0 0.0
  %644 = vmatpush1.xpose.msra.mxu0 0.0
  %645 = vmatprep.subr.mxu0 0.0
  %646 = vmatpush1.xpose.msra.mxu0 0.0
  %647 = vmatprep.subr.mxu0 0.0
  %648 = vmatpush1.xpose.msra.mxu0 0.0
  %649 = vmatprep.subr.mxu0 0.0
  %650 = vmatpush1.xpose.msra.mxu0 0.0
  %651 = vmatprep.subr.mxu0 0.0
  %652 = vmatpush1.xpose.msra.mxu0 0.0
  %653 = vmatprep.subr.mxu0 0.0
  %654 = vmatpush1.xpose.msra.mxu0 0.0
  %655 = vmatprep.subr.mxu0 0.0
  %656 = vmatpush1.xpose.msra.mxu0 0.0
  %657 = vmatprep.subr.mxu0 0.0
  %658 = vmatpush1.xpose.msra.mxu0 0.0
  %659 = vmatprep.subr.mxu0 0.0
  %660 = vmatpush1.xpose.msra.mxu0 0.0
  %661 = vmatprep.subr.mxu0 0.0
  %662 = vmatpush1.xpose.msra.mxu0 0.0
  %663 = vmatprep.subr.mxu0 0.0
  %664 = vmatpush1.xpose.msra.mxu0 0.0
  %665 = vmatprep.subr.mxu0 0.0
  %666 = vmatpush1.xpose.msra.mxu0 0.0
  %667 = vmatprep.subr.mxu0 0.0
  %668 = vmatpush1.xpose.msra.mxu0 0.0
  %669 = vmatprep.subr.mxu0 0.0
  %670 = vmatpush1.xpose.msra.mxu0 0.0
  %671 = vmatprep.subr.mxu0 0.0
  %672 = vmatpush1.xpose.msra.mxu0 0.0
  %673 = vmatprep.subr.mxu0 0.0
  %674 = vmatpush1.xpose.msra.mxu0 0.0
  %675 = vmatprep.subr.mxu0 0.0
  %676 = vmatpush1.xpose.msra.mxu0 0.0
  %677 = vmatprep.subr.mxu0 0.0
  %678 = vmatpush1.xpose.msra.mxu0 0.0
  %679 = vmatprep.subr.mxu0 0.0
  %680 = vmatpush1.xpose.msra.mxu0 0.0
  %681 = vmatprep.mubr.f32.mxu0 0.0
  %682 = vmatmul.mubr.f32.gmra.mrb[0].mxu0 %v613
  %v683 = vpop.f32.mrb[0].mxu0
  %v684 = vadd.f32 0.0, %v683
  %v685 = vpop.f32.mrb[0].mxu0
  %686 = vdwg.mxu0
  %v687 = vlaneseq
  %v688 = vshrl.u32 %v687, 7
  %v689 = vsub.s32 0, %v688
  %v690 = vrot.slane %v684, %v689
  %v691 = vadd.f32 %v608, %v690
  %vm692 = vcmp.gt.f32.partialorder %v691, 0.0
  %v693 = vmul.f32 %v691, 0.2
  %v694 = vsel %vm692, %v691, %v693
  %v695 = vadd.f32 %v694, %v120
  %v696 = vsel %vm317, %v695, -inf
  %697 = vmax.xlane.f32.xlu0 %v696
  %v698 = vpop.xlane.xlu0 %697
  %v699 = vsub.f32 %v695, %v698
  %v700 = vmul.f32 %v699, 1.442695
  %v701 = vpow.pop %v700
  %v702 = vsel %vm317, %v701, 0.0
  %703 = vadd.xlane.f32.xlu0 %v702
  %v704 = vpop.xlane.xlu0 %703
  %v705 = vrcp.pop %v704
  %v706 = vmul.f32 %v701, %v705
  %708 = vrot.lane.b32.xlu0 %v332, 64
  %v709 = vpop.permute.xlu0 %708
  %v712 = vsel %vm317, %v706, 0
  %714 = vmatprep.subr.mxu0 0.0
  %715 = vmatpush1.msra.mxu0 %v612
  %716 = vmatprep.subr.mxu0 0.0
  %717 = vmatpush1.msra.mxu0 0.0
  %718 = vmatprep.subr.mxu0 0.0
  %719 = vmatpush1.msra.mxu0 0.0
  %720 = vmatprep.subr.mxu0 0.0
  %721 = vmatpush1.msra.mxu0 0.0
  %722 = vmatprep.subr.mxu0 0.0
  %723 = vmatpush1.msra.mxu0 0.0
  %724 = vmatprep.subr.mxu0 0.0
  %725 = vmatpush1.msra.mxu0 0.0
  %726 = vmatprep.subr.mxu0 0.0
  %727 = vmatpush1.msra.mxu0 0.0
  %728 = vmatprep.subr.mxu0 0.0
  %729 = vmatpush1.msra.mxu0 0.0
  %730 = vmatprep.subr.mxu0 0.0
  %731 = vmatpush1.msra.mxu0 0.0
  %732 = vmatprep.subr.mxu0 0.0
  %733 = vmatpush1.msra.mxu0 0.0
  %734 = vmatprep.subr.mxu0 0.0
  %735 = vmatpush1.msra.mxu0 0.0
  %736 = vmatprep.subr.mxu0 0.0
  %737 = vmatpush1.msra.mxu0 0.0
  %738 = vmatprep.subr.mxu0 0.0
  %739 = vmatpush1.msra.mxu0 0.0
  %740 = vmatprep.subr.mxu0 0.0
  %741 = vmatpush1.msra.mxu0 0.0
  %742 = vmatprep.subr.mxu0 0.0
  %743 = vmatpush1.msra.mxu0 0.0
  %744 = vmatprep.subr.mxu0 0.0
  %745 = vmatpush1.msra.mxu0 0.0
  %746 = vmatprep.subr.mxu0 0.0
  %747 = vmatpush1.msra.mxu0 0.0
  %748 = vmatprep.subr.mxu0 0.0
  %749 = vmatpush1.msra.mxu0 0.0
  %750 = vmatprep.subr.mxu0 0.0
  %751 = vmatpush1.msra.mxu0 0.0
  %752 = vmatprep.subr.mxu0 0.0
  %753 = vmatpush1.msra.mxu0 0.0
  %754 = vmatprep.subr.mxu0 0.0
  %755 = vmatpush1.msra.mxu0 0.0
  %756 = vmatprep.subr.mxu0 0.0
  %757 = vmatpush1.msra.mxu0 0.0
  %758 = vmatprep.subr.mxu0 0.0
  %759 = vmatpush1.msra.mxu0 0.0
  %760 = vmatprep.subr.mxu0 0.0
  %761 = vmatpush1.msra.mxu0 0.0
  %762 = vmatprep.subr.mxu0 0.0
  %763 = vmatpush1.msra.mxu0 0.0
  %764 = vmatprep.subr.mxu0 0.0
  %765 = vmatpush1.msra.mxu0 0.0
  %766 = vmatprep.subr.mxu0 0.0
  %767 = vmatpush1.msra.mxu0 0.0
  %768 = vmatprep.subr.mxu0 0.0
  %769 = vmatpush1.msra.mxu0 0.0
  %770 = vmatprep.subr.mxu0 0.0
  %771 = vmatpush1.msra.mxu0 0.0
  %772 = vmatprep.subr.mxu0 0.0
  %773 = vmatpush1.msra.mxu0 0.0
  %774 = vmatprep.subr.mxu0 0.0
  %775 = vmatpush1.msra.mxu0 0.0
  %776 = vmatprep.subr.mxu0 0.0
  %777 = vmatpush1.msra.mxu0 0.0
  %778 = vmatprep.mubr.f32.mxu0 0.0
  %779 = vmatmul.mubr.f32.gmra.mrb[0].mxu0 %v712
  %v780 = vpop.f32.mrb[0].mxu0
  %v781 = vadd.f32 %v709, %v780
  %v782 = vpop.f32.mrb[0].mxu0
  %783 = vdwg.mxu0
  %v784 = vmul.f32 %v781, %v781
  %v785 = vsel %vm228, %v784, 0.0
  %786 = vadd.xlane.f32.xlu0 %v785
  %v787 = vpop.xlane.xlu0 %786
  %v788 = vmax.f32 %v787, 1e-24
  %v789 = vrsqrt.pop %v788
  %v790 = vmul.f32 %v781, %v789
  %792 = vrot.lane.b32.xlu0 %v602, 32
  %v793 = vpop.permute.xlu0 %792
  %796 = vrot.lane.b32.xlu0 %v790, 64
  %v797 = vpop.permute.xlu0 %796
  %v799 = vsel %vm228, %v412, %v793
  %vm800 = vcmask 523264
  %v801 = vsel %vm800, %v799, %v797
  %v802 = vld [vmem:[%s3] sm:$0xff]
  %v803 = vld [vmem:[%s3 + $0x8] sm:$0xff]
  %v804 = vld [vmem:[%s3 + $0x10] sm:$0xff]
  %v805 = vld [vmem:[%s3 + $0x18] sm:$0xff]
  %v806 = vld [vmem:[%s3 + $0x20] sm:$0xff]
  %v807 = vld [vmem:[%s3 + $0x28] sm:$0xff]
  %v808 = vld [vmem:[%s3 + $0x30] sm:$0xff]
  %v809 = vld [vmem:[%s3 + $0x38] sm:$0xff]
  %v810 = vld [vmem:[%s3 + $0x40] sm:$0xff]
  %v811 = vld [vmem:[%s3 + $0x48] sm:$0xff]
  %v812 = vld [vmem:[%s3 + $0x50] sm:$0xff]
  %v813 = vld [vmem:[%s3 + $0x58] sm:$0xff]
  %v814 = vlaneseq
  %v815 = vshrl.u32 %v814, 7
  %v816 = vsub.s32 0, %v815
  %v817 = vrot.slane %v222, %v816
  %vm818 = vcmask 785408
  %v820 = vsel %vm818, %v801, 0
  %822 = vmatprep.subr.mxu0 0.0
  %823 = vmatpush1.msra.mxu0 %v802
  %824 = vmatprep.subr.mxu0 0.0
  %825 = vmatpush1.msra.mxu0 %v803
  %826 = vmatprep.subr.mxu0 0.0
  %827 = vmatpush1.msra.mxu0 %v804
  %828 = vmatprep.subr.mxu0 0.0
  %829 = vmatpush1.msra.mxu0 %v805
  %830 = vmatprep.subr.mxu0 0.0
  %831 = vmatpush1.msra.mxu0 %v806
  %832 = vmatprep.subr.mxu0 0.0
  %833 = vmatpush1.msra.mxu0 %v807
  %834 = vmatprep.subr.mxu0 0.0
  %835 = vmatpush1.msra.mxu0 %v808
  %836 = vmatprep.subr.mxu0 0.0
  %837 = vmatpush1.msra.mxu0 %v809
  %838 = vmatprep.subr.mxu0 0.0
  %839 = vmatpush1.msra.mxu0 %v810
  %840 = vmatprep.subr.mxu0 0.0
  %841 = vmatpush1.msra.mxu0 %v811
  %842 = vmatprep.subr.mxu0 0.0
  %843 = vmatpush1.msra.mxu0 %v812
  %844 = vmatprep.subr.mxu0 0.0
  %845 = vmatpush1.msra.mxu0 %v813
  %846 = vmatprep.subr.mxu0 0.0
  %847 = vmatpush1.msra.mxu0 0.0
  %848 = vmatprep.subr.mxu0 0.0
  %849 = vmatpush1.msra.mxu0 0.0
  %850 = vmatprep.subr.mxu0 0.0
  %851 = vmatpush1.msra.mxu0 0.0
  %852 = vmatprep.subr.mxu0 0.0
  %853 = vmatpush1.msra.mxu0 0.0
  %854 = vmatprep.subr.mxu0 0.0
  %855 = vmatpush1.msra.mxu0 0.0
  %856 = vmatprep.subr.mxu0 0.0
  %857 = vmatpush1.msra.mxu0 0.0
  %858 = vmatprep.subr.mxu0 0.0
  %859 = vmatpush1.msra.mxu0 0.0
  %860 = vmatprep.subr.mxu0 0.0
  %861 = vmatpush1.msra.mxu0 0.0
  %862 = vmatprep.subr.mxu0 0.0
  %863 = vmatpush1.msra.mxu0 0.0
  %864 = vmatprep.subr.mxu0 0.0
  %865 = vmatpush1.msra.mxu0 0.0
  %866 = vmatprep.subr.mxu0 0.0
  %867 = vmatpush1.msra.mxu0 0.0
  %868 = vmatprep.subr.mxu0 0.0
  %869 = vmatpush1.msra.mxu0 0.0
  %870 = vmatprep.subr.mxu0 0.0
  %871 = vmatpush1.msra.mxu0 0.0
  %872 = vmatprep.subr.mxu0 0.0
  %873 = vmatpush1.msra.mxu0 0.0
  %874 = vmatprep.subr.mxu0 0.0
  %875 = vmatpush1.msra.mxu0 0.0
  %876 = vmatprep.subr.mxu0 0.0
  %877 = vmatpush1.msra.mxu0 0.0
  %878 = vmatprep.subr.mxu0 0.0
  %879 = vmatpush1.msra.mxu0 0.0
  %880 = vmatprep.subr.mxu0 0.0
  %881 = vmatpush1.msra.mxu0 0.0
  %882 = vmatprep.subr.mxu0 0.0
  %883 = vmatpush1.msra.mxu0 0.0
  %884 = vmatprep.subr.mxu0 0.0
  %885 = vmatpush1.msra.mxu0 0.0
  %886 = vmatprep.mubr.f32.mxu0 0.0
  %887 = vmatmul.mubr.f32.gmra.mrb[0].mxu0 %v820
  %v888 = vpop.f32.mrb[0].mxu0
  %v889 = vadd.f32 %v817, %v888
  %v890 = vpop.f32.mrb[0].mxu0
  %891 = vdwg.mxu0
  %893 = vrot.lane.b32.xlu0 %v889, 96
  %v894 = vpop.permute.xlu0 %893
  %v896 = vsel %vm818, %v801, %v894
  %897 = vst [vmem:[%s5] sm:$0xff] %v896
  // Predicated region
  $region22: #{mm_model_forward.1} parent=0 // pred_check
    _
  $region23: #{mm_model_forward.1} parent=0 // pred_check_branch
    %899 = sbr.rel (0) target = $region25
  $region24: #{mm_model_forward.1} parent=0 // pred_region
    _
  $region25: #{mm_model_forward.1} parent=0 // pred_fallthru
    _
  // Predicated region
  $region26: #{mm_model_forward.1} parent=0 // pred_check
    _
  $region27: #{mm_model_forward.1} parent=0 // pred_check_branch
    %901 = sbr.rel (0) target = $region29
  $region28: #{mm_model_forward.1} parent=0 // pred_region
    _
  $region29: #{mm_model_forward.1} parent=0 // pred_fallthru
    _

</llo_original>
